<compile_context>
chip_gen: v5e
topology: v5e:2x2
jax: 0.10.0
libtpu: 0.0.40
codegen_flags: <defaults>
</compile_context>

<pallas_src>
import jax
import jax.numpy as jnp
from jax.experimental import pallas as pl
from jax.experimental.pallas import tpu as pltpu


_LANES = 512            # lane-dense row width (multiple of 128)


def _round_up(x, m):
    return ((x + m - 1) // m) * m


def _tensorcores_per_chip():
    """Best-effort: v7x has 2 TensorCores per chip, v5e/v6e have 1."""
    try:
        kind = (getattr(jax.devices()[0], "device_kind", "") or "").lower()
        if "v7" in kind:
            return 2
    except Exception:
        pass
    return 1


# ---------------------------------------------------------------------------
# Pallas kernel: fused L1 partial sums for (output1, target) and (output2, target)
# ---------------------------------------------------------------------------
def _l1_sums_kernel(o1_ref, o2_ref, t_ref, s1_ref, s2_ref):
    i = pl.program_id(1)                      # accumulation ("arbitrary") axis

    @pl.when(i == 0)
    def _init():
        s1_ref[...] = jnp.zeros_like(s1_ref)  # resident (8, LANES) output block
        s2_ref[...] = jnp.zeros_like(s2_ref)

    t = t_ref[...].astype(jnp.float32)
    o1 = o1_ref[...].astype(jnp.float32)
    o2 = o2_ref[...].astype(jnp.float32)
    rows, lanes = o1.shape
    g = rows // 8
    # Reduce the tile to one (8, LANES) vreg-row group in-step: the reshape
    # keeps the (8, lane) tiling intact and the axis-0 sum is plain vreg-vreg
    # VALU adds -- no cross-lane (XLU) reduction until the tiny wrapper sum.
    s1_ref[...] += jnp.sum(jnp.abs(o1 - t).reshape(g, 8, lanes), axis=0)
    s2_ref[...] += jnp.sum(jnp.abs(o2 - t).reshape(g, 8, lanes), axis=0)


def _pack_to_slab(arr_list, padded_rows, lanes):
    """Write flattened pieces once into a zero-padded lane-dense slab.

    Single pass over the stream (static offsets -> static update slices);
    replaces the previous concatenate-copy followed by pad-copy.  The native
    dtype is preserved so bf16 predictor outputs are not widened before DMA.
    """
    dtype = jnp.result_type(*[a.dtype for a in arr_list])
    buf = jnp.zeros((padded_rows * lanes,), dtype)
    off = 0
    for a in arr_list:
        flat = a.reshape(-1).astype(dtype)
        n = int(flat.shape[0])
        buf = buf.at[off:off + n].set(flat)
        off += n
    return buf.reshape(padded_rows, lanes)


def l1_losses_pallas(output1_list, output2_list, target_list):
    """(mean |o1-t|, mean |o2-t|) over the concatenated per-utterance streams."""
    n_true = sum(int(a.size) for a in target_list)
    assert n_true == sum(int(a.size) for a in output1_list)
    assert n_true == sum(int(a.size) for a in output2_list)
    assert n_true > 0

    halves = _tensorcores_per_chip()          # 2 only on v7x (megacore split)
    max_tile_rows = 2048 if halves == 2 else 1024

    rows_needed = pl.cdiv(n_true, _LANES)
    tile_rows = min(max_tile_rows, _round_up(rows_needed, 8))
    padded_rows = _round_up(rows_needed, halves * tile_rows)

    x1 = _pack_to_slab(output1_list, padded_rows, _LANES)
    x2 = _pack_to_slab(output2_list, padded_rows, _LANES)
    xt = _pack_to_slab(target_list, padded_rows, _LANES)

    tiles_per_half = padded_rows // (halves * tile_rows)
    grid = (halves, tiles_per_half)

    in_spec = pl.BlockSpec(
        (tile_rows, _LANES), lambda c, i: (c * tiles_per_half + i, 0)
    )
    out_spec = pl.BlockSpec((None, 8, _LANES), lambda c, i: (c, 0, 0))

    in_bytes = sum(int(x.size) * x.dtype.itemsize for x in (x1, x2, xt))
    out_bytes = 2 * halves * 8 * _LANES * 4
    cost = pl.CostEstimate(
        flops=6 * padded_rows * _LANES,       # 2x (sub + abs + add) per element
        transcendentals=0,
        bytes_accessed=in_bytes + out_bytes,
    )

    # 3 inputs x 2 pipeline buffers x tile: <= ~12 MiB (v5e/v6e) / ~24 MiB (v7x
    # with f32 + 2048-row tiles); keep well under v7x's 64 MiB physical VMEM.
    vmem_limit = (48 if halves == 2 else 32) * 1024 * 1024

    s1, s2 = pl.pallas_call(
        _l1_sums_kernel,
        out_shape=(
            jax.ShapeDtypeStruct((halves, 8, _LANES), jnp.float32),
            jax.ShapeDtypeStruct((halves, 8, _LANES), jnp.float32),
        ),
        grid_spec=pltpu.PrefetchScalarGridSpec(
            num_scalar_prefetch=0,
            grid=grid,
            in_specs=[in_spec, in_spec, in_spec],
            out_specs=(out_spec, out_spec),
        ),
        compiler_params=pltpu.CompilerParams(
            dimension_semantics=("parallel", "arbitrary"),
            vmem_limit_bytes=vmem_limit,
        ),
        cost_estimate=cost,
    )(x1, x2, xt)

    inv_n = 1.0 / float(n_true)               # F.l1_loss reduction='mean'
    loss1 = jnp.sum(s1) * inv_n               # tiny (halves,8,512) final reduce, f32
    loss2 = jnp.sum(s2) * inv_n
    return loss1, loss2


# ---------------------------------------------------------------------------
# Deterministic synthetic predictor (glue; the real Predictor is an external
# module whose architecture is not given in this file).
# TODO(synk): the true yukarin_sosoa Predictor (conv/transformer stack) is not
#             defined in the provided source; a deterministic linear stand-in
#             with two output heads is used so the Model forward is runnable.
# TODO(synk): fusing the head matmuls with the L1 reduction (to avoid the HBM
#             round-trip of output1/output2) is not done because the real
#             Predictor is external to this module.
# ---------------------------------------------------------------------------
def make_predictor_params(phoneme_vocab, n_speakers, hidden, spec_dim):
    def det(shape, scale, offset):
        n = 1
        for s in shape:
            n *= s
        v = (jnp.arange(n, dtype=jnp.float32) % 17 - 8.0) * scale + offset
        return v.reshape(shape)

    return {
        "phoneme_emb": det((phoneme_vocab, hidden), 0.01, 0.0),
        "speaker_emb": det((n_speakers, hidden), 0.02, 0.0),
        "f0_proj": det((1, hidden), 0.05, 0.1),
        "head1_w": det((hidden, spec_dim), 0.03, 0.0),
        "head1_b": det((spec_dim,), 0.001, 0.0),
        "head2_w": det((hidden, spec_dim), -0.02, 0.0),
        "head2_b": det((spec_dim,), 0.002, 0.0),
    }


def predictor_forward(params, f0_list, phoneme_list, speaker_id):
    out1_list, out2_list = [], []
    for idx, (f0, ph) in enumerate(zip(f0_list, phoneme_list)):
        h = params["phoneme_emb"][ph]                       # (T, H)
        h = h + f0 @ params["f0_proj"]                      # (T, H)
        if speaker_id is not None:
            h = h + params["speaker_emb"][speaker_id[idx]][None, :]
        h = jnp.tanh(h)
        out1_list.append(h @ params["head1_w"] + params["head1_b"])
        out2_list.append(h @ params["head2_w"] + params["head2_b"])
    return out1_list, out2_list


# ---------------------------------------------------------------------------
# Model.forward equivalent
# ---------------------------------------------------------------------------
def model_forward(params, data):
    batch_size = len(data["spec"])
    speaker_id = (
        jnp.stack(data["speaker_id"]) if data["speaker_id"] is not None else None
    )
    output1_list, output2_list = predictor_forward(
        params, data["f0"], data["phoneme"], speaker_id
    )
    # The explicit torch.cat equivalents are skipped: the loss only needs the
    # concatenated *stream*, which is packed once directly into the kernel's
    # lane-dense slabs (saves two extra HBM passes per stream).
    loss1, loss2 = l1_losses_pallas(output1_list, output2_list, data["spec"])
    loss = loss1 + loss2
    return {
        "loss": loss,
        "loss1": loss1,
        "loss2": loss2,
        "data_num": batch_size,
    }


if __name__ == "__main__":
    key = jax.random.PRNGKey(0)
    lengths = [8, 13]          # variable-length utterances (exercises padding path)
    batch = len(lengths)
    spec_dim = 32
    hidden = 32
    phoneme_vocab = 16
    n_speakers = 4

    params = make_predictor_params(phoneme_vocab, n_speakers, hidden, spec_dim)

    keys = jax.random.split(key, 3 * batch)
    data = {
        "f0": [
            jax.random.uniform(keys[i], (lengths[i], 1), jnp.float32, 0.0, 1.0)
            for i in range(batch)
        ],
        "phoneme": [
            jax.random.randint(keys[batch + i], (lengths[i],), 0, phoneme_vocab)
            for i in range(batch)
        ],
        "spec": [
            jax.random.normal(keys[2 * batch + i], (lengths[i], spec_dim), jnp.float32)
            for i in range(batch)
        ],
        "speaker_id": [jnp.int32(i % n_speakers) for i in range(batch)],
    }

    out = model_forward(params, data)
    jax.block_until_ready(out["loss"])

    # sanity check against plain-JAX reference
    o1l, o2l = predictor_forward(
        params, data["f0"], data["phoneme"], jnp.stack(data["speaker_id"])
    )
    o1 = jnp.concatenate(o1l, 0)
    o2 = jnp.concatenate(o2l, 0)
    tgt = jnp.concatenate(data["spec"], 0)
    ref1 = jnp.mean(jnp.abs(o1 - tgt))
    ref2 = jnp.mean(jnp.abs(o2 - tgt))
    assert jnp.allclose(out["loss1"], ref1, rtol=1e-5, atol=1e-5)
    assert jnp.allclose(out["loss2"], ref2, rtol=1e-5, atol=1e-5)
    assert jnp.allclose(out["loss"], ref1 + ref2, rtol=1e-5, atol=1e-5)
    assert out["data_num"] == batch

    print("KERNEL_OK")
</pallas_src>

<mosaic_0001>
module attributes {stable_mosaic.version = 11 : i64} {
  func.func @_l1_sums_kernel(%arg0: i32, %arg1: i32, %arg2: memref<8x512xf32, #tpu.memory_space<vmem>>, %arg3: memref<8x512xf32, #tpu.memory_space<vmem>>, %arg4: memref<8x512xf32, #tpu.memory_space<vmem>>, %arg5: memref<1x8x512xf32, #tpu.memory_space<vmem>>, %arg6: memref<1x8x512xf32, #tpu.memory_space<vmem>>) attributes {dimension_semantics = [#tpu.dimension_semantics<parallel>, #tpu.dimension_semantics<arbitrary>], iteration_bounds = array<i64: 1, 1>, scalar_prefetch = 0 : i64, scratch_operands = 0 : i64, tpu.core_type = #tpu.core_type<tc>, window_params = [{transform_indices = @transform_0, window_bounds = array<i64: 8, 512>}, {transform_indices = @transform_1, window_bounds = array<i64: 8, 512>}, {transform_indices = @transform_2, window_bounds = array<i64: 8, 512>}, {transform_indices = @transform_3, window_bounds = array<i64: 1, 8, 512>}, {transform_indices = @transform_4, window_bounds = array<i64: 1, 8, 512>}]} {
    %c0_i32 = arith.constant 0 : i32
    %0 = arith.cmpi eq, %arg1, %c0_i32 : i32
    %1 = arith.extui %0 : i1 to i32
    %c0_i32_0 = arith.constant 0 : i32
    %2 = arith.cmpi ne, %1, %c0_i32_0 : i32
    scf.if %2 {
      %cst_19 = arith.constant 0.000000e+00 : f32
      %26 = vector.broadcast %cst_19 : f32 to vector<8x512xf32>
      %c0_20 = arith.constant 0 : index
      %c0_21 = arith.constant 0 : index
      %c0_22 = arith.constant 0 : index
      %27 = vector.load %arg5[%c0_20, %c0_21, %c0_22] : memref<1x8x512xf32, #tpu.memory_space<vmem>>, vector<1x8x512xf32>
      %28 = vector.shape_cast %27 : vector<1x8x512xf32> to vector<8x512xf32>
      %29 = vector.shape_cast %26 : vector<8x512xf32> to vector<1x8x512xf32>
      tpu.vector_store %arg5[%c0_20, %c0_21, %c0_22], %29 {strides = array<i32>} : memref<1x8x512xf32, #tpu.memory_space<vmem>>, vector<1x8x512xf32>,
      %cst_23 = arith.constant 0.000000e+00 : f32
      %30 = vector.broadcast %cst_23 : f32 to vector<8x512xf32>
      %c0_24 = arith.constant 0 : index
      %c0_25 = arith.constant 0 : index
      %c0_26 = arith.constant 0 : index
      %31 = vector.load %arg6[%c0_24, %c0_25, %c0_26] : memref<1x8x512xf32, #tpu.memory_space<vmem>>, vector<1x8x512xf32>
      %32 = vector.shape_cast %31 : vector<1x8x512xf32> to vector<8x512xf32>
      %33 = vector.shape_cast %30 : vector<8x512xf32> to vector<1x8x512xf32>
      tpu.vector_store %arg6[%c0_24, %c0_25, %c0_26], %33 {strides = array<i32>} : memref<1x8x512xf32, #tpu.memory_space<vmem>>, vector<1x8x512xf32>,
    } else {
    }
    %c0 = arith.constant 0 : index
    %c0_1 = arith.constant 0 : index
    %3 = vector.load %arg4[%c0, %c0_1] : memref<8x512xf32, #tpu.memory_space<vmem>>, vector<8x512xf32>
    %c0_2 = arith.constant 0 : index
    %c0_3 = arith.constant 0 : index
    %4 = vector.load %arg2[%c0_2, %c0_3] : memref<8x512xf32, #tpu.memory_space<vmem>>, vector<8x512xf32>
    %c0_4 = arith.constant 0 : index
    %c0_5 = arith.constant 0 : index
    %5 = vector.load %arg3[%c0_4, %c0_5] : memref<8x512xf32, #tpu.memory_space<vmem>>, vector<8x512xf32>
    %c0_6 = arith.constant 0 : index
    %c0_7 = arith.constant 0 : index
    %c0_8 = arith.constant 0 : index
    %6 = vector.load %arg5[%c0_6, %c0_7, %c0_8] : memref<1x8x512xf32, #tpu.memory_space<vmem>>, vector<1x8x512xf32>
    %7 = vector.shape_cast %6 : vector<1x8x512xf32> to vector<8x512xf32>
    %8 = arith.subf %4, %3 : vector<8x512xf32>
    %9 = math.absf %8 : vector<8x512xf32>
    %10 = vector.shape_cast %9 : vector<8x512xf32> to vector<1x8x512xf32>
    %cst = arith.constant dense<0.000000e+00> : vector<8x512xf32>
    %11 = vector.multi_reduction <add>, %10, %cst [0] : vector<1x8x512xf32> to vector<8x512xf32>
    %12 = arith.addf %7, %11 : vector<8x512xf32>
    %c0_9 = arith.constant 0 : index
    %c0_10 = arith.constant 0 : index
    %c0_11 = arith.constant 0 : index
    %13 = vector.load %arg5[%c0_9, %c0_10, %c0_11] : memref<1x8x512xf32, #tpu.memory_space<vmem>>, vector<1x8x512xf32>
    %14 = vector.shape_cast %13 : vector<1x8x512xf32> to vector<8x512xf32>
    %15 = vector.shape_cast %12 : vector<8x512xf32> to vector<1x8x512xf32>
    tpu.vector_store %arg5[%c0_9, %c0_10, %c0_11], %15 {strides = array<i32>} : memref<1x8x512xf32, #tpu.memory_space<vmem>>, vector<1x8x512xf32>,
    %c0_12 = arith.constant 0 : index
    %c0_13 = arith.constant 0 : index
    %c0_14 = arith.constant 0 : index
    %16 = vector.load %arg6[%c0_12, %c0_13, %c0_14] : memref<1x8x512xf32, #tpu.memory_space<vmem>>, vector<1x8x512xf32>
    %17 = vector.shape_cast %16 : vector<1x8x512xf32> to vector<8x512xf32>
    %18 = arith.subf %5, %3 : vector<8x512xf32>
    %19 = math.absf %18 : vector<8x512xf32>
    %20 = vector.shape_cast %19 : vector<8x512xf32> to vector<1x8x512xf32>
    %cst_15 = arith.constant dense<0.000000e+00> : vector<8x512xf32>
    %21 = vector.multi_reduction <add>, %20, %cst_15 [0] : vector<1x8x512xf32> to vector<8x512xf32>
    %22 = arith.addf %17, %21 : vector<8x512xf32>
    %c0_16 = arith.constant 0 : index
    %c0_17 = arith.constant 0 : index
    %c0_18 = arith.constant 0 : index
    %23 = vector.load %arg6[%c0_16, %c0_17, %c0_18] : memref<1x8x512xf32, #tpu.memory_space<vmem>>, vector<1x8x512xf32>
    %24 = vector.shape_cast %23 : vector<1x8x512xf32> to vector<8x512xf32>
    %25 = vector.shape_cast %22 : vector<8x512xf32> to vector<1x8x512xf32>
    tpu.vector_store %arg6[%c0_16, %c0_17, %c0_18], %25 {strides = array<i32>} : memref<1x8x512xf32, #tpu.memory_space<vmem>>, vector<1x8x512xf32>,
    return
  }
  func.func @transform_0(%arg0: i32, %arg1: i32) -> (i32, i32) {
    %c1_i32 = arith.constant 1 : i32
    %0 = arith.muli %arg0, %c1_i32 : i32
    %1 = arith.addi %0, %arg1 : i32
    %c0_i32 = arith.constant 0 : i32
    %c0_i32_0 = arith.constant 0 : i32
    return %1, %c0_i32 : i32, i32
  }
  func.func @transform_1(%arg0: i32, %arg1: i32) -> (i32, i32) {
    %c1_i32 = arith.constant 1 : i32
    %0 = arith.muli %arg0, %c1_i32 : i32
    %1 = arith.addi %0, %arg1 : i32
    %c0_i32 = arith.constant 0 : i32
    %c0_i32_0 = arith.constant 0 : i32
    return %1, %c0_i32 : i32, i32
  }
  func.func @transform_2(%arg0: i32, %arg1: i32) -> (i32, i32) {
    %c1_i32 = arith.constant 1 : i32
    %0 = arith.muli %arg0, %c1_i32 : i32
    %1 = arith.addi %0, %arg1 : i32
    %c0_i32 = arith.constant 0 : i32
    %c0_i32_0 = arith.constant 0 : i32
    return %1, %c0_i32 : i32, i32
  }
  func.func @transform_3(%arg0: i32, %arg1: i32) -> (i32, i32, i32) {
    %c0_i32 = arith.constant 0 : i32
    %c0_i32_0 = arith.constant 0 : i32
    %c0_i32_1 = arith.constant 0 : i32
    return %arg0, %c0_i32, %c0_i32_0 : i32, i32, i32
  }
  func.func @transform_4(%arg0: i32, %arg1: i32) -> (i32, i32, i32) {
    %c0_i32 = arith.constant 0 : i32
    %c0_i32_0 = arith.constant 0 : i32
    %c0_i32_1 = arith.constant 0 : i32
    return %arg0, %c0_i32, %c0_i32_0 : i32, i32, i32
  }
}

</mosaic_0001>

<llo_original>
// kernel: tpu_custom_call.1
$region0: #{tpu_custom_call.1}
  #allocation0 [shape = 'u32[]', space=smem, size = 0x4, offset = 0x4, fixed_abs, tag = 'smem constant byte address 0x4 - core index']
  #allocation1 [shape = 'u32[72,128]{1,0:T(1,128)}', space=vmem, size = 0x9000, scoped, tag = 'internal scratch']
  %s0 = inlined_call_operand.hbm [shape: f32[8,512], index: 0, kind: input, shape index: {}]
  %s1 = inlined_call_operand.hbm [shape: f32[8,512], index: 1, kind: input, shape index: {}]
  %s2 = inlined_call_operand.hbm [shape: f32[8,512], index: 2, kind: input, shape index: {}]
  %s3 = inlined_call_operand.hbm [shape: f32[1,8,512], index: 3, kind: output, shape index: {0}]
  %s4 = inlined_call_operand.hbm [shape: f32[1,8,512], index: 4, kind: output, shape index: {1}]
  %5 = xla_tuple %s3, %s4
  %s6 = sld [smem:[#allocation0]]
  $region46: #{tpu_custom_call.1} parent=0
    _
  %s8 = ssub.s32 1, %s6
  %s9 = scalar_select 0, %s8, %s6
  $region1: #{tpu_custom_call.1} parent=0
    #allocation2 [shape = 'u8[16384]{0}', space=vmem, size = 0x4000, scoped, tag = 'input window, operand 0, single buffered']
    #allocation3 [shape = 's32[1]{0}', space=sflag, size = 0x4, scoped, tag = 'scoped memory for tpu_custom_call.1']
    #allocation4 [shape = 's32[1]{0}', space=sflag, size = 0x4, scoped, tag = 'scoped memory for tpu_custom_call.1']
    #allocation5 [shape = 'u8[16384]{0}', space=vmem, size = 0x4000, scoped, tag = 'input window, operand 1, single buffered']
    #allocation6 [shape = 's32[1]{0}', space=sflag, size = 0x4, scoped, tag = 'scoped memory for tpu_custom_call.1']
    #allocation7 [shape = 'u8[16384]{0}', space=vmem, size = 0x4000, scoped, tag = 'input window, operand 2, single buffered']
    #allocation8 [shape = 'u8[16384]{0}', space=vmem, size = 0x4000, scoped, tag = 'output window, operand 0, single buffered']
    #allocation9 [shape = 'u8[16384]{0}', space=vmem, size = 0x4000, scoped, tag = 'output window, operand 1, single buffered']
    #allocation10 [shape = 's32[1]{0}', space=sflag, size = 0x4, scoped, tag = 'scoped memory for tpu_custom_call.1']
    %10 = vsyncpa [#allocation3], 0
    %11 = vsyncpa [#allocation6], 0
    %12 = vsyncpa [#allocation4], 0
    %13 = vsyncpa [#allocation10], 0
    // Predicated region
    $region2: #{tpu_custom_call.1} parent=1 // pred_check
      _
    $region3: #{tpu_custom_call.1} parent=1 // pred_check_branch
      %15 = sbr.rel (0) target = $region5
    $region4: #{tpu_custom_call.1} parent=1 // pred_region
      %s16 = sadd.s32 0, 0
      %18 = vsyncadd [#allocation3], 0
      %s19 = smul.addr %s16, 4
      %s20 = smul.addr %s19, 8
      %s21 = scalar_lea.hbm %s0, %s20
      %s23 = sshll.u32 %s21, 4
      %s24 = int_to_ptr.hbm [resolvable:$true] %s23
      %s25 = sshll.u32 [#allocation2], 4
      %s26 = int_to_ptr.vmem [resolvable:$true] %s25
      %28 = dma.hbm_to_vmem [thread:$0]  %s24, 512, %s26, [#allocation3]
    $region5: #{tpu_custom_call.1} parent=1 // pred_fallthru
      _
    // Predicated region
    $region6: #{tpu_custom_call.1} parent=1 // pred_check
      _
    $region7: #{tpu_custom_call.1} parent=1 // pred_check_branch
      %30 = sbr.rel (0) target = $region9
    $region8: #{tpu_custom_call.1} parent=1 // pred_region
      %s31 = sadd.s32 0, 0
      %33 = vsyncadd [#allocation6], 0
      %s34 = smul.addr %s31, 4
      %s35 = smul.addr %s34, 8
      %s36 = scalar_lea.hbm %s1, %s35
      %s38 = sshll.u32 %s36, 4
      %s39 = int_to_ptr.hbm [resolvable:$true] %s38
      %s40 = sshll.u32 [#allocation5], 4
      %s41 = int_to_ptr.vmem [resolvable:$true] %s40
      %43 = dma.hbm_to_vmem [thread:$0]  %s39, 512, %s41, [#allocation6]
    $region9: #{tpu_custom_call.1} parent=1 // pred_fallthru
      _
    // Predicated region
    $region10: #{tpu_custom_call.1} parent=1 // pred_check
      _
    $region11: #{tpu_custom_call.1} parent=1 // pred_check_branch
      %45 = sbr.rel (0) target = $region13
    $region12: #{tpu_custom_call.1} parent=1 // pred_region
      %s46 = sadd.s32 0, 0
      %48 = vsyncadd [#allocation6], 0
      %s49 = smul.addr %s46, 4
      %s50 = smul.addr %s49, 8
      %s51 = scalar_lea.hbm %s2, %s50
      %s53 = sshll.u32 %s51, 4
      %s54 = int_to_ptr.hbm [resolvable:$true] %s53
      %s55 = sshll.u32 [#allocation7], 4
      %s56 = int_to_ptr.vmem [resolvable:$true] %s55
      %58 = dma.hbm_to_vmem [thread:$0]  %s54, 512, %s56, [#allocation6]
    $region13: #{tpu_custom_call.1} parent=1 // pred_fallthru
      _
    // Predicated region
    $region14: #{tpu_custom_call.1} parent=1 // pred_check
      _
    $region15: #{tpu_custom_call.1} parent=1 // pred_check_branch
      %60 = sbr.rel (0) target = $region17
    $region16: #{tpu_custom_call.1} parent=1 // pred_region
      %62 = dma.done [#allocation3], 512
    $region17: #{tpu_custom_call.1} parent=1 // pred_fallthru
      _
    // Predicated region
    $region18: #{tpu_custom_call.1} parent=1 // pred_check
      _
    $region19: #{tpu_custom_call.1} parent=1 // pred_check_branch
      %64 = sbr.rel (0) target = $region21
    $region20: #{tpu_custom_call.1} parent=1 // pred_region
      %66 = dma.done [#allocation6], 512
    $region21: #{tpu_custom_call.1} parent=1 // pred_fallthru
      _
    // Predicated region
    $region22: #{tpu_custom_call.1} parent=1 // pred_check
      _
    $region23: #{tpu_custom_call.1} parent=1 // pred_check_branch
      %68 = sbr.rel (0) target = $region25
    $region24: #{tpu_custom_call.1} parent=1 // pred_region
      %70 = dma.done [#allocation6], 512
    $region25: #{tpu_custom_call.1} parent=1 // pred_fallthru
      _
    %s71 = sadd.s32 0, 0
    %s72 = sadd.s32 0, 0
    %s73 = sadd.s32 0, 0
    %p74 = scmp.eq.s32.totalorder 0, 0
    // Predicated region
    $region26: #{tpu_custom_call.1} parent=1 // pred_check
      %p75 = pneg %p74
    $region27: #{tpu_custom_call.1} parent=1 // pred_check_branch
      %77 = sbr.rel (%p75) target = $region29
    $region28: #{tpu_custom_call.1} parent=1 // pred_region
      %78 = vst [vmem:[#allocation8] sm:$0xff] 0.0
      %79 = vst [vmem:[#allocation8 + $0x8] sm:$0xff] 0.0
      %80 = vst [vmem:[#allocation8 + $0x10] sm:$0xff] 0.0
      %81 = vst [vmem:[#allocation8 + $0x18] sm:$0xff] 0.0
      %82 = vst [vmem:[#allocation9] sm:$0xff] 0.0
      %83 = vst [vmem:[#allocation9 + $0x8] sm:$0xff] 0.0
      %84 = vst [vmem:[#allocation9 + $0x10] sm:$0xff] 0.0
      %85 = vst [vmem:[#allocation9 + $0x18] sm:$0xff] 0.0
    $region29: #{tpu_custom_call.1} parent=1 // pred_fallthru
      _
    %v86 = vld [vmem:[#allocation7] sm:$0xff]
    %v87 = vld [vmem:[#allocation7 + $0x8] sm:$0xff]
    %v88 = vld [vmem:[#allocation7 + $0x10] sm:$0xff]
    %v89 = vld [vmem:[#allocation7 + $0x18] sm:$0xff]
    %v90 = vld [vmem:[#allocation2] sm:$0xff]
    %v91 = vld [vmem:[#allocation2 + $0x8] sm:$0xff]
    %v92 = vld [vmem:[#allocation2 + $0x10] sm:$0xff]
    %v93 = vld [vmem:[#allocation2 + $0x18] sm:$0xff]
    %v94 = vld [vmem:[#allocation5] sm:$0xff]
    %v95 = vld [vmem:[#allocation5 + $0x8] sm:$0xff]
    %v96 = vld [vmem:[#allocation5 + $0x10] sm:$0xff]
    %v97 = vld [vmem:[#allocation5 + $0x18] sm:$0xff]
    %v98 = vld [vmem:[#allocation8] sm:$0xff]
    %v99 = vld [vmem:[#allocation8 + $0x8] sm:$0xff]
    %v100 = vld [vmem:[#allocation8 + $0x10] sm:$0xff]
    %v101 = vld [vmem:[#allocation8 + $0x18] sm:$0xff]
    %v102 = vsub.f32 %v90, %v86
    %v103 = vsub.f32 %v91, %v87
    %v104 = vsub.f32 %v92, %v88
    %v105 = vsub.f32 %v93, %v89
    %v106 = vand.u32 2147483647, %v102
    %v107 = vand.u32 2147483647, %v103
    %v108 = vand.u32 2147483647, %v104
    %v109 = vand.u32 2147483647, %v105
    %v110 = vadd.f32 %v106, 0.0
    %v111 = vadd.f32 %v107, 0.0
    %v112 = vadd.f32 %v108, 0.0
    %v113 = vadd.f32 %v109, 0.0
    %v114 = vadd.f32 %v98, %v110
    %v115 = vadd.f32 %v99, %v111
    %v116 = vadd.f32 %v100, %v112
    %v117 = vadd.f32 %v101, %v113
    %118 = vst [vmem:[#allocation8] sm:$0xff] %v114
    %119 = vst [vmem:[#allocation8 + $0x8] sm:$0xff] %v115
    %120 = vst [vmem:[#allocation8 + $0x10] sm:$0xff] %v116
    %121 = vst [vmem:[#allocation8 + $0x18] sm:$0xff] %v117
    %v122 = vld [vmem:[#allocation9] sm:$0xff]
    %v123 = vld [vmem:[#allocation9 + $0x8] sm:$0xff]
    %v124 = vld [vmem:[#allocation9 + $0x10] sm:$0xff]
    %v125 = vld [vmem:[#allocation9 + $0x18] sm:$0xff]
    %v126 = vsub.f32 %v94, %v86
    %v127 = vsub.f32 %v95, %v87
    %v128 = vsub.f32 %v96, %v88
    %v129 = vsub.f32 %v97, %v89
    %v130 = vand.u32 2147483647, %v126
    %v131 = vand.u32 2147483647, %v127
    %v132 = vand.u32 2147483647, %v128
    %v133 = vand.u32 2147483647, %v129
    %v134 = vadd.f32 %v130, 0.0
    %v135 = vadd.f32 %v131, 0.0
    %v136 = vadd.f32 %v132, 0.0
    %v137 = vadd.f32 %v133, 0.0
    %v138 = vadd.f32 %v122, %v134
    %v139 = vadd.f32 %v123, %v135
    %v140 = vadd.f32 %v124, %v136
    %v141 = vadd.f32 %v125, %v137
    %142 = vst [vmem:[#allocation9] sm:$0xff] %v138
    %143 = vst [vmem:[#allocation9 + $0x8] sm:$0xff] %v139
    %144 = vst [vmem:[#allocation9 + $0x10] sm:$0xff] %v140
    %145 = vst [vmem:[#allocation9 + $0x18] sm:$0xff] %v141
    // Predicated region
    $region30: #{tpu_custom_call.1} parent=1 // pred_check
      _
    $region31: #{tpu_custom_call.1} parent=1 // pred_check_branch
      %147 = sbr.rel (0) target = $region33
    $region32: #{tpu_custom_call.1} parent=1 // pred_region
      %149 = vsyncadd [#allocation4], 0
      %s151 = sshll.u32 [#allocation8], 4
      %s152 = int_to_ptr.vmem [resolvable:$true] %s151
      %s153 = sshll.u32 %s3, 4
      %s154 = int_to_ptr.hbm [resolvable:$true] %s153
      %156 = dma.vmem_to_hbm [thread:$0]  %s152, 512, %s154, [#allocation4]
    $region33: #{tpu_custom_call.1} parent=1 // pred_fallthru
      _
    // Predicated region
    $region34: #{tpu_custom_call.1} parent=1 // pred_check
      _
    $region35: #{tpu_custom_call.1} parent=1 // pred_check_branch
      %158 = sbr.rel (0) target = $region37
    $region36: #{tpu_custom_call.1} parent=1 // pred_region
      %160 = vsyncadd [#allocation10], 0
      %s162 = sshll.u32 [#allocation9], 4
      %s163 = int_to_ptr.vmem [resolvable:$true] %s162
      %s164 = sshll.u32 %s4, 4
      %s165 = int_to_ptr.hbm [resolvable:$true] %s164
      %167 = dma.vmem_to_hbm [thread:$0]  %s163, 512, %s165, [#allocation10]
    $region37: #{tpu_custom_call.1} parent=1 // pred_fallthru
      _
    // Predicated region
    $region38: #{tpu_custom_call.1} parent=1 // pred_check
      _
    $region39: #{tpu_custom_call.1} parent=1 // pred_check_branch
      %169 = sbr.rel (0) target = $region41
    $region40: #{tpu_custom_call.1} parent=1 // pred_region
      %171 = dma.done [#allocation4], 512
    $region41: #{tpu_custom_call.1} parent=1 // pred_fallthru
      _
    // Predicated region
    $region42: #{tpu_custom_call.1} parent=1 // pred_check
      _
    $region43: #{tpu_custom_call.1} parent=1 // pred_check_branch
      %173 = sbr.rel (0) target = $region45
    $region44: #{tpu_custom_call.1} parent=1 // pred_region
      %175 = dma.done [#allocation10], 512
    $region45: #{tpu_custom_call.1} parent=1 // pred_fallthru
      _
    %176 = vsyncpa [#allocation3], 1
    %177 = vsyncpa [#allocation6], 1
    %178 = vsyncpa [#allocation4], 1
    %179 = vsyncpa [#allocation10], 1

</llo_original>
